<compile_context>
chip_gen: v7x
topology: tpu7x:2x2x1
jax: 0.10.0
libtpu: 0.0.40
codegen_flags: <defaults>
</compile_context>

<pallas_src>
import functools

import jax
import jax.numpy as jnp
import numpy as np
from jax.experimental import pallas as pl
from jax.experimental.pallas import tpu as pltpu

NEG_BIG = -1000000.0   # matches torch.tensor(-1000000.0)


def _round_up(v, m):
    return ((v + m - 1) // m) * m


def _umm_kernel(x_ref, params_ref, out_ref):
    # x_ref:      (2, TN)       current tile of samples (coords on sublanes 0/1)
    # params_ref: (K_pad, 8)    packed per-component constants:
    #                           [lo0, lo1, up0, up1, eins, 0, 0, 0]
    # out_ref:    (1, TN)       per-sample log-likelihood
    k_pad = params_ref.shape[0]
    tn = x_ref.shape[1]
    shape = (k_pad, tn)

    params = params_ref[...]                    # tiny (K_pad, 8) load
    lo0 = params[:, 0:1]                        # (K_pad, 1) columns; implicit
    lo1 = params[:, 1:2]                        # lane-broadcast in the compares
    up0 = params[:, 2:3]
    up1 = params[:, 3:4]
    eins = params[:, 4:5]                       # exp(log_w - sum_log_sizes); 0 for pad

    # Hoist the two sublane broadcasts once each (JAX does not CSE them).
    x0 = jnp.broadcast_to(x_ref[0:1, :], shape)
    x1 = jnp.broadcast_to(x_ref[1:2, :], shape)

    within = (x0 >= lo0) & (x0 <= up0) & (x1 >= lo1) & (x1 <= up1)
    contrib = jnp.where(within, eins, 0.0)                       # (K_pad, TN)
    s = jnp.sum(contrib, axis=0, keepdims=True)                  # (1, TN) sublane reduce
    # No component contains x  ->  reference returns exactly NEG_BIG.
    out_ref[...] = jnp.where(s > 0.0, jnp.log(s), NEG_BIG)


@functools.partial(jax.jit, static_argnames=("tile_n",))
def umm_log_likelihood_t(x_t, weights, centers, log_sizes, *, tile_n=32768):
    """x_t: (2, N) float32 (pre-transposed); returns (N,) log-likelihood."""
    n = x_t.shape[1]
    k = weights.shape[0]
    k_pad = _round_up(k, 8)

    # All K-sized parameter math hoisted out of the kernel (trivially cheap).
    log_weights = jax.nn.log_softmax(weights.astype(jnp.float32))      # (K,)
    log_sizes_f = log_sizes.astype(jnp.float32)
    sizes = jnp.exp(log_sizes_f)                                       # (K, 2)
    centers_f = centers.astype(jnp.float32)
    lower = centers_f - sizes * 0.5                                    # (K, 2)
    upper = centers_f + sizes * 0.5                                    # (K, 2)
    # Pre-exponentiated inside-box contribution (removes in-kernel exp/max).
    eins = jnp.exp(log_weights - jnp.sum(log_sizes_f, axis=-1))        # (K,)

    pad = k_pad - k

    def col(v, fill):
        return jnp.pad(v, (0, pad), constant_values=fill)

    zeros = jnp.zeros((k_pad,), jnp.float32)
    # Packed (K_pad, 8) param block.  Padded comps: lower > upper and eins = 0.
    params = jnp.stack(
        [col(lower[:, 0], 1.0), col(lower[:, 1], 1.0),
         col(upper[:, 0], -1.0), col(upper[:, 1], -1.0),
         col(eins, 0.0), zeros, zeros, zeros],
        axis=1)                                                        # (K_pad, 8)

    # Tile selection:
    #  - large lane tile to amortize ~0.35 us/step grid overhead,
    #  - >= 2 grid steps where possible so v7x's two TensorCores both get work,
    #  - VMEM guard: keep (K_pad, tile) f32 temporaries bounded even if K grows
    #    (relevant for v7x's 64 MiB VMEM).
    vmem_cap = max(128, (((2 << 20) // (4 * k_pad)) // 128) * 128)
    half = _round_up(max((n + 1) // 2, 1), 128)
    eff_tile = max(128, min(tile_n, half, vmem_cap))
    grid = (pl.cdiv(n, eff_tile),)

    out = pl.pallas_call(
        _umm_kernel,
        out_shape=jax.ShapeDtypeStruct((1, n), jnp.float32),
        grid_spec=pltpu.PrefetchScalarGridSpec(
            num_scalar_prefetch=0,
            grid=grid,
            in_specs=[
                pl.BlockSpec((2, eff_tile), lambda i: (0, i)),
                pl.BlockSpec((k_pad, 8), lambda i: (0, 0)),
            ],
            out_specs=pl.BlockSpec((1, eff_tile), lambda i: (0, i)),
        ),
        compiler_params=pltpu.CompilerParams(
            dimension_semantics=("parallel",),
            vmem_limit_bytes=32 * 1024 * 1024),
    )(x_t, params)
    return out[0]


@functools.partial(jax.jit, static_argnames=("tile_n",))
def umm_log_likelihood(x, weights, centers, log_sizes, *, tile_n=32768):
    """x: (N, 2); weights: (K,); centers: (K, 2); log_sizes: (K, 2) -> (N,).

    Convenience wrapper matching the PyTorch forward signature.  The
    (N,2)->(2,N) transpose is a separate HBM pass; repeatedly-called code
    should pre-transpose once and call `umm_log_likelihood_t` directly.
    """
    x_t = jnp.asarray(x, jnp.float32).T                                # (2, N)
    return umm_log_likelihood_t(x_t, weights, centers, log_sizes, tile_n=tile_n)


def _reference(x, weights, centers, log_sizes):
    log_weights = jax.nn.log_softmax(weights)
    sizes = jnp.exp(log_sizes)
    lower = centers - sizes / 2
    upper = centers + sizes / 2
    within = jnp.all((x[:, None, :] >= lower[None]) & (x[:, None, :] <= upper[None]),
                     axis=-1)
    sum_log_sizes = log_sizes.sum(-1)
    log_pxk = jnp.where(within, -sum_log_sizes, NEG_BIG)
    return jax.scipy.special.logsumexp(log_weights + log_pxk, axis=1)


if __name__ == "__main__":
    # TODO(synk): loss_function / sample / conditional_sample are host-side
    # utilities (multinomial sampling etc.) and are not implemented as kernels.
    key = jax.random.PRNGKey(0)
    k_x, k_w, k_c, k_s = jax.random.split(key, 4)

    n_samples = 256
    n_components = 8

    # Deterministic parameter init mirroring the PyTorch __init__ shapes.
    weights = jax.random.normal(k_w, (n_components,), jnp.float32)
    centers = jax.random.normal(k_c, (n_components, 2), jnp.float32)
    log_sizes = jnp.log(
        3.0 * jnp.ones((n_components, 2), jnp.float32)
        + jax.random.uniform(k_s, (n_components, 2), jnp.float32) * 0.2)

    x = jax.random.normal(k_x, (n_samples, 2), jnp.float32) * 2.0

    ll = umm_log_likelihood(x, weights, centers, log_sizes)
    ll = jax.block_until_ready(ll)

    ref = _reference(x, weights, centers, log_sizes)
    np.testing.assert_allclose(np.asarray(ll), np.asarray(ref),
                               rtol=1e-5, atol=1e-5)
    print("KERNEL_OK")
</pallas_src>

<mosaic_0001>
module attributes {stable_mosaic.version = 11 : i64} {
  func.func @_umm_kernel(%arg0: i32, %arg1: memref<2x128xf32, #tpu.memory_space<vmem>>, %arg2: memref<8x8xf32, #tpu.memory_space<vmem>>, %arg3: memref<1x128xf32, #tpu.memory_space<vmem>>) attributes {dimension_semantics = [#tpu.dimension_semantics<parallel>], iteration_bounds = array<i64: 2>, scalar_prefetch = 0 : i64, scratch_operands = 0 : i64, tpu.core_type = #tpu.core_type<tc>, window_params = [{transform_indices = @transform_0, window_bounds = array<i64: 2, 128>}, {pipeline_mode = #tpu.pipeline_mode<synchronous>, transform_indices = @transform_1, window_bounds = array<i64: 8, 8>}, {transform_indices = @transform_2, window_bounds = array<i64: 1, 128>}]} {
    %c0 = arith.constant 0 : index
    %c0_0 = arith.constant 0 : index
    %0 = vector.load %arg2[%c0, %c0_0] : memref<8x8xf32, #tpu.memory_space<vmem>>, vector<8x8xf32>
    %1 = vector.extract_strided_slice %0 {offsets = [0, 0], sizes = [8, 1], strides = [1, 1]} : vector<8x8xf32> to vector<8x1xf32>
    %2 = vector.extract_strided_slice %0 {offsets = [0, 1], sizes = [8, 1], strides = [1, 1]} : vector<8x8xf32> to vector<8x1xf32>
    %3 = vector.extract_strided_slice %0 {offsets = [0, 2], sizes = [8, 1], strides = [1, 1]} : vector<8x8xf32> to vector<8x1xf32>
    %4 = vector.extract_strided_slice %0 {offsets = [0, 3], sizes = [8, 1], strides = [1, 1]} : vector<8x8xf32> to vector<8x1xf32>
    %5 = vector.extract_strided_slice %0 {offsets = [0, 4], sizes = [8, 1], strides = [1, 1]} : vector<8x8xf32> to vector<8x1xf32>
    %c0_1 = arith.constant 0 : index
    %c0_2 = arith.constant 0 : index
    %6 = vector.load %arg1[%c0_1, %c0_2] : memref<2x128xf32, #tpu.memory_space<vmem>>, vector<1x128xf32>
    %7 = vector.shape_cast %6 : vector<1x128xf32> to vector<1x128xf32>
    %8 = vector.broadcast %7 : vector<1x128xf32> to vector<8x128xf32>
    %c1 = arith.constant 1 : index
    %c0_3 = arith.constant 0 : index
    %9 = vector.load %arg1[%c1, %c0_3] : memref<2x128xf32, #tpu.memory_space<vmem>>, vector<1x128xf32>
    %10 = vector.shape_cast %9 : vector<1x128xf32> to vector<1x128xf32>
    %11 = vector.broadcast %10 : vector<1x128xf32> to vector<8x128xf32>
    %12 = vector.broadcast %1 : vector<8x1xf32> to vector<8x128xf32>
    %13 = arith.cmpf oge, %8, %12 : vector<8x128xf32>
    %14 = vector.broadcast %3 : vector<8x1xf32> to vector<8x128xf32>
    %15 = arith.cmpf ole, %8, %14 : vector<8x128xf32>
    %16 = arith.andi %13, %15 : vector<8x128xi1>
    %17 = vector.broadcast %2 : vector<8x1xf32> to vector<8x128xf32>
    %18 = arith.cmpf oge, %11, %17 : vector<8x128xf32>
    %19 = arith.andi %16, %18 : vector<8x128xi1>
    %20 = vector.broadcast %4 : vector<8x1xf32> to vector<8x128xf32>
    %21 = arith.cmpf ole, %11, %20 : vector<8x128xf32>
    %22 = arith.andi %19, %21 : vector<8x128xi1>
    %cst = arith.constant 0.000000e+00 : f32
    %23 = vector.shape_cast %5 : vector<8x1xf32> to vector<8x1xf32>
    %24 = vector.broadcast %23 : vector<8x1xf32> to vector<8x128xf32>
    %25 = vector.broadcast %cst : f32 to vector<8x128xf32>
    %26 = arith.select %22, %24, %25 : vector<8x128xi1>, vector<8x128xf32>
    %cst_4 = arith.constant dense<0.000000e+00> : vector<128xf32>
    %27 = vector.multi_reduction <add>, %26, %cst_4 [0] : vector<8x128xf32> to vector<128xf32>
    %28 = vector.shape_cast %27 : vector<128xf32> to vector<1x128xf32>
    %cst_5 = arith.constant 0.000000e+00 : f32
    %29 = vector.broadcast %cst_5 : f32 to vector<1x128xf32>
    %30 = arith.cmpf ogt, %28, %29 : vector<1x128xf32>
    %31 = math.log %28 : vector<1x128xf32>
    %cst_6 = arith.constant -1.000000e+06 : f32
    %32 = vector.broadcast %cst_6 : f32 to vector<1x128xf32>
    %33 = arith.select %30, %31, %32 : vector<1x128xi1>, vector<1x128xf32>
    %c0_7 = arith.constant 0 : index
    %c0_8 = arith.constant 0 : index
    %34 = vector.load %arg3[%c0_7, %c0_8] : memref<1x128xf32, #tpu.memory_space<vmem>>, vector<1x128xf32>
    tpu.vector_store %arg3[%c0_7, %c0_8], %33 {strides = array<i32>} : memref<1x128xf32, #tpu.memory_space<vmem>>, vector<1x128xf32>,
    return
  }
  func.func @transform_0(%arg0: i32) -> (i32, i32) {
    %c0_i32 = arith.constant 0 : i32
    %c0_i32_0 = arith.constant 0 : i32
    return %c0_i32, %arg0 : i32, i32
  }
  func.func @transform_1(%arg0: i32) -> (i32, i32) {
    %c0_i32 = arith.constant 0 : i32
    %c0_i32_0 = arith.constant 0 : i32
    %c0_i32_1 = arith.constant 0 : i32
    return %c0_i32, %c0_i32_0 : i32, i32
  }
  func.func @transform_2(%arg0: i32) -> (i32, i32) {
    %c0_i32 = arith.constant 0 : i32
    %c0_i32_0 = arith.constant 0 : i32
    return %c0_i32, %arg0 : i32, i32
  }
}

</mosaic_0001>

<llo_original>
// kernel: umm_log_likelihood_t.1
$region0: #{umm_log_likelihood_t.1}
  #allocation0 [shape = 'u32[]', space=smem, size = 0x4, offset = 0x4, fixed_abs, tag = 'smem constant byte address 0x4 - core index']
  #allocation1 [shape = 'u32[144,128]{1,0:T(1,128)}', space=vmem, size = 0x12000, scoped, tag = 'internal scratch']
  %s0 = inlined_call_operand.vmem [shape: f32[2,256], index: 0, kind: input, shape index: {}]
  %s1 = inlined_call_operand.vmem [shape: f32[8,8], index: 1, kind: input, shape index: {}]
  %s2 = inlined_call_operand.hbm [shape: f32[1,256], index: 2, kind: output, shape index: {}]
  %s3 = sld [smem:[#allocation0]]
  $region41: #{umm_log_likelihood_t.1} parent=0
    _
  %s5 = ssub.s32 1, %s3
  %s6 = scalar_select 0, %s5, %s3
  $region1: #{umm_log_likelihood_t.1} parent=0
    #allocation2 [shape = 'u8[1024]{0}', space=vmem, size = 0x400, scoped, tag = 'output window, operand 0']
    #allocation3 [shape = 's32[2]{0}', space=sflag, size = 0x8, scoped, tag = 'scoped memory for umm_log_likelihood_t.1']
    %7 = vsyncpa [#allocation3], 0
    %s8 = scalar_lea.sflag [#allocation3], 1
    %9 = vsyncpa %s8, 0
    loop: start=0, step=1, limit=4
    $region2: #{umm_log_likelihood_t.1} parent=1 // loop_pre_header
      _
    $region3: #{umm_log_likelihood_t.1} parent=1 // loop_header
      %s11 = sphi 0, %s15
      %p12 = scmp.ge.s32.totalorder %s11, 4
      %s21 = sphi 0, %s23
      %s24 = sphi 0, %s21
      %s25 = sphi 0, %s24
      %s41 = sphi 0, %s25
      %s45 = sphi 0, %s45
      %s47 = sphi 0, %s45
      %s48 = sphi 0, %s47
      %s62 = sphi 0, %s48
      %s68 = sphi 0, %s70
      %s71 = sphi 0, %s68
      %s72 = sphi 0, %s71
      %s88 = sphi 0, %s72
    $region4: #{umm_log_likelihood_t.1} parent=1 // loop_header_branch
      %14 = sbr.rel (%p12) target = $region8
    $region5: #{umm_log_likelihood_t.1} parent=1 // loop_body
      %s16 = ssub.s32 %s11, 1
      %s17 = ssub.s32 %s11, 2
      %s18 = sadd.s32 %s11, 1
      %s19 = ssub.s32 %s11, %s18
      %p20 = scmp.eq.s32.totalorder %s19, 0
      %s22 = sadd.s32 %s21, 1
      %s23 = scalar_select %p20, %s21, %s22
      %p26 = pneg %p20
      %p27 = scmp.eq.s32.totalorder %s11, 1
      %p28 = por %p26, %p27
      %p29 = scmp.ne.s32.totalorder %s21, %s24
      %p30 = scmp.eq.s32.totalorder %s11, 0
      %p31 = por %p29, %p30
      %p32 = scmp.ne.s32.totalorder %s21, %s24
      %p33 = scmp.eq.s32.totalorder %s16, 1
      %p34 = por %p32, %p33
      %p35 = scmp.ne.s32.totalorder %s24, %s25
      %p36 = scmp.eq.s32.totalorder %s16, 0
      %p37 = por %p35, %p36
      %p38 = scmp.ne.s32.totalorder %s24, %s25
      %p39 = scmp.eq.s32.totalorder %s17, 1
      %p40 = por %p38, %p39
      %p42 = scmp.ne.s32.totalorder %s25, %s41
      %p43 = scmp.eq.s32.totalorder %s17, 0
      %p44 = por %p42, %p43
      %s46 = sadd.s32 %s45, 1
      %p49 = scmp.eq.s32.totalorder %s11, 1
      %p50 = scmp.ne.s32.totalorder %s45, %s47
      %p51 = scmp.eq.s32.totalorder %s11, 0
      %p52 = por %p50, %p51
      %p53 = scmp.ne.s32.totalorder %s45, %s47
      %p54 = scmp.eq.s32.totalorder %s16, 1
      %p55 = por %p53, %p54
      %p56 = scmp.ne.s32.totalorder %s47, %s48
      %p57 = scmp.eq.s32.totalorder %s16, 0
      %p58 = por %p56, %p57
      %p59 = scmp.ne.s32.totalorder %s47, %s48
      %p60 = scmp.eq.s32.totalorder %s17, 1
      %p61 = por %p59, %p60
      %p63 = scmp.ne.s32.totalorder %s48, %s62
      %p64 = scmp.eq.s32.totalorder %s17, 0
      %p65 = por %p63, %p64
      %s66 = ssub.s32 %s11, %s18
      %p67 = scmp.eq.s32.totalorder %s66, 0
      %s69 = sadd.s32 %s68, 1
      %s70 = scalar_select %p67, %s68, %s69
      %p73 = pneg %p67
      %p74 = scmp.eq.s32.totalorder %s11, 1
      %p75 = por %p73, %p74
      %p76 = scmp.ne.s32.totalorder %s68, %s71
      %p77 = scmp.eq.s32.totalorder %s11, 0
      %p78 = por %p76, %p77
      %p79 = scmp.ne.s32.totalorder %s68, %s71
      %p80 = scmp.eq.s32.totalorder %s16, 1
      %p81 = por %p79, %p80
      %p82 = scmp.ne.s32.totalorder %s71, %s72
      %p83 = scmp.eq.s32.totalorder %s16, 0
      %p84 = por %p82, %p83
      %p85 = scmp.ne.s32.totalorder %s71, %s72
      %p86 = scmp.eq.s32.totalorder %s17, 1
      %p87 = por %p85, %p86
      %p89 = scmp.ne.s32.totalorder %s72, %s88
      %p90 = scmp.eq.s32.totalorder %s17, 0
      %p91 = por %p89, %p90
      %p92 = scmp.le.s32.totalorder 1, %s11
      %p93 = scmp.lt.s32.totalorder %s11, 3
      %p94 = pnand %p92, %p93
      %p95 = pneg %p94
      // Predicated region
      $region9: #{umm_log_likelihood_t.1} parent=5 // pred_check
        _
      $region10: #{umm_log_likelihood_t.1} parent=5 // pred_check_branch
        %97 = sbr.rel (%p94) target = $region12
      $region11: #{umm_log_likelihood_t.1} parent=5 // pred_region
        %s98 = ssub.s32 %s11, 1
        // Predicated region
        $region13: #{umm_log_likelihood_t.1} parent=11 // pred_check
          %p99 = pneg %p58
        $region14: #{umm_log_likelihood_t.1} parent=11 // pred_check_branch
          %101 = sbr.rel (%p99) target = $region16
        $region15: #{umm_log_likelihood_t.1} parent=11 // pred_region
          _
        $region16: #{umm_log_likelihood_t.1} parent=11 // pred_fallthru
          _
      $region12: #{umm_log_likelihood_t.1} parent=5 // pred_fallthru
        _
      %p102 = scmp.lt.s32.totalorder %s11, 2
      // Predicated region
      $region17: #{umm_log_likelihood_t.1} parent=5 // pred_check
        %p103 = pneg %p102
      $region18: #{umm_log_likelihood_t.1} parent=5 // pred_check_branch
        %105 = sbr.rel (%p103) target = $region20
      $region19: #{umm_log_likelihood_t.1} parent=5 // pred_region
        // Predicated region
        $region21: #{umm_log_likelihood_t.1} parent=19 // pred_check
          %p106 = pneg %p31
        $region22: #{umm_log_likelihood_t.1} parent=19 // pred_check_branch
          %108 = sbr.rel (%p106) target = $region24
        $region23: #{umm_log_likelihood_t.1} parent=19 // pred_region
          %p109 = scmp.lt.s32.totalorder %s11, 1
          %s110 = scalar_select %p109, %s11, 1
          %s111 = smul.addr %s110, 2
          %s112 = scalar_lea.vmem %s0, %s111
        $region24: #{umm_log_likelihood_t.1} parent=19 // pred_fallthru
          _
      $region20: #{umm_log_likelihood_t.1} parent=5 // pred_fallthru
        _
      %p113 = scmp.le.s32.totalorder 1, %s11
      %p114 = scmp.lt.s32.totalorder %s11, 3
      %p115 = pnand %p113, %p114
      %p116 = pneg %p115
      // Predicated region
      $region25: #{umm_log_likelihood_t.1} parent=5 // pred_check
        _
      $region26: #{umm_log_likelihood_t.1} parent=5 // pred_check_branch
        %118 = sbr.rel (%p115) target = $region28
      $region27: #{umm_log_likelihood_t.1} parent=5 // pred_region
        %s119 = ssub.s32 %s11, 1
        %p120 = scmp.lt.s32.totalorder %s16, 1
        %s121 = scalar_select %p120, %s16, 1
        %s122 = smul.addr %s121, 2
        %s123 = scalar_lea.vmem %s0, %s122
        %p124 = pneg %p37
        %p125 = pneg %p34
        %p126 = pneg %p58
        %p127 = pneg %p55
        %p128 = pneg %p84
        %p129 = pneg %p81
        %s130 = sand.u32 %s71, 1
        %s131 = scalar_lea.sflag [#allocation3], %s130
        %s132 = sand.u32 %s71, 1
        %s133 = scalar_lea.vmem [#allocation2], %s132
        %p134 = scmp.lt.s32.totalorder %s16, 1
        %s135 = scalar_select %p134, %s16, 1
        %s136 = smul.addr %s135, 2
        %s137 = scalar_lea.vmem %s0, %s136
        %v138 = vld [vmem:[%s1] sm:$0xff]
        %v139 = vld [vmem:[%s137] sm:$0x1]
        %v140 = vlaneseq
        %v141 = vshrl.u32 %v140, 7
        %v142 = vsub.s32 0, %v141
        %v143 = vrot.slane %v139, %v142
        %v144 = vld [vmem:[%s137 + $0x1] sm:$0x1]
        %v145 = vlaneseq
        %v146 = vshrl.u32 %v145, 7
        %v147 = vsub.s32 0, %v146
        %v148 = vrot.slane %v144, %v147
        %150 = vset.pattern.permute.xlu0 0
        %151 = vperm.xlu0 %150, %v138
        %v152 = vpop.permute.xlu0 %151
        %vm154 = vcmp.ge.f32.partialorder %v143, %v152
        %155 = vset.pattern.permute.xlu0 2
        %156 = vperm.xlu0 %155, %v138
        %v157 = vpop.permute.xlu0 %156
        %vm159 = vcmp.le.f32.partialorder %v143, %v157
        %vm160 = vmand %vm154, %vm159
        %161 = vset.pattern.permute.xlu0 1
        %162 = vperm.xlu0 %161, %v138
        %v163 = vpop.permute.xlu0 %162
        %vm165 = vcmp.ge.f32.partialorder %v148, %v163
        %vm166 = vmand %vm160, %vm165
        %167 = vset.pattern.permute.xlu0 3
        %168 = vperm.xlu0 %167, %v138
        %v169 = vpop.permute.xlu0 %168
        %vm171 = vcmp.le.f32.partialorder %v148, %v169
        %vm172 = vmand %vm166, %vm171
        %173 = vset.pattern.permute.xlu0 4
        %174 = vperm.xlu0 %173, %v138
        %v175 = vpop.permute.xlu0 %174
        %v177 = vsel %vm172, %v175, 0.0
        %v178 = vrot.slane %v177, 4
        %v179 = vadd.f32 %v177, %v178
        %v180 = vrot.slane %v179, 2
        %v181 = vadd.f32 %v179, %v180
        %v182 = vrot.slane %v181, 1
        %v183 = vadd.f32 %v181, %v182
        %vm184 = vcmp.gt.f32.partialorder %v183, 0.0
        %v185 = vlog2.pop %v183
        %v186 = vmul.f32 %v185, 0.6931472
        %v187 = vsel %vm184, %v186, -1000000.0
        %188 = vst [vmem:[%s133] sm:$0x1] %v187
        %s189 = sand.u32 %s71, 1
        %s190 = scalar_lea.sflag [#allocation3], %s189
        %s191 = sand.u32 %s71, 1
        %s192 = scalar_lea.vmem [#allocation2], %s191
        // Predicated region
        $region29: #{umm_log_likelihood_t.1} parent=27 // pred_check
          %p193 = pneg %p81
        $region30: #{umm_log_likelihood_t.1} parent=27 // pred_check_branch
          %195 = sbr.rel (%p193) target = $region32
        $region31: #{umm_log_likelihood_t.1} parent=27 // pred_region
          %s197 = ssub.s32 16, 16
          %198 = vsyncadd %s190, %s197
          %s199 = smul.addr %s16, 16
          %s200 = scalar_lea.hbm %s2, %s199
          %s202 = sshll.u32 %s192, 4
          %s203 = int_to_ptr.vmem [resolvable:$true] %s202
          %205 = dma.vmem_to_hbm [thread:$0]  %s203, 16, %s200, %s190
        $region32: #{umm_log_likelihood_t.1} parent=27 // pred_fallthru
          _
      $region28: #{umm_log_likelihood_t.1} parent=5 // pred_fallthru
        _
      %p206 = scmp.le.s32.totalorder 2, %s11
      // Predicated region
      $region33: #{umm_log_likelihood_t.1} parent=5 // pred_check
        %p207 = pneg %p206
      $region34: #{umm_log_likelihood_t.1} parent=5 // pred_check_branch
        %209 = sbr.rel (%p207) target = $region36
      $region35: #{umm_log_likelihood_t.1} parent=5 // pred_region
        %s210 = ssub.s32 %s11, 2
        // Predicated region
        $region37: #{umm_log_likelihood_t.1} parent=35 // pred_check
          %p211 = pneg %p87
        $region38: #{umm_log_likelihood_t.1} parent=35 // pred_check_branch
          %213 = sbr.rel (%p211) target = $region40
        $region39: #{umm_log_likelihood_t.1} parent=35 // pred_region
          %s214 = sand.u32 %s72, 1
          %s215 = scalar_lea.sflag [#allocation3], %s214
          %s216 = sand.u32 %s72, 1
          %s217 = scalar_lea.vmem [#allocation2], %s216
          %218 = dma.done %s215, 16
        $region40: #{umm_log_likelihood_t.1} parent=35 // pred_fallthru
          _
      $region36: #{umm_log_likelihood_t.1} parent=5 // pred_fallthru
        _
    $region6: #{umm_log_likelihood_t.1} parent=1 // loop_footer
      %s15 = sadd.s32 1, %s11
    $region7: #{umm_log_likelihood_t.1} parent=1 // loop_footer_branch
      %10 = sbr.rel target = $region3
    $region8: #{umm_log_likelihood_t.1} parent=1 // loop_exit
      _
    %219 = vsyncpa [#allocation3], 1
    %s220 = scalar_lea.sflag [#allocation3], 1
    %221 = vsyncpa %s220, 1

</llo_original>
